<compile_context>
chip_gen: v7x
topology: tpu7x:2x2x1
jax: 0.10.0
libtpu: 0.0.40
codegen_flags: <defaults>
</compile_context>

<pallas_src>
import functools

import jax
import jax.numpy as jnp
from jax.experimental import pallas as pl
from jax.experimental.pallas import tpu as pltpu


def _round_up(n, m):
    return ((n + m - 1) // m) * m


def _cdiv(a, b):
    return -(-a // b)


def _mlp_kernel(x_ref, w1_ref, b1_ref, w2_ref, b2_ref, o_ref):
    """One batch tile of: y = ReLU(x @ W1t + b1) @ W2t + b2.

    x_ref : [TB,   IN_P ]  bf16  (batch tile, steps with the grid)
    w1_ref: [IN_P, H_P  ]  bf16  (pre-transposed, VMEM-resident, single-buffered)
    b1_ref: [1,    H_P  ]  f32
    w2_ref: [H_P,  OUT_P]  bf16  (pre-transposed, VMEM-resident, single-buffered)
    b2_ref: [1,    OUT_P]  f32
    o_ref : [TB,   OUT_P]  bf16
    """
    # Layer 1: straight [M,K]x[K,N] MXU contraction, f32 accumulation.
    h = jnp.dot(x_ref[...], w1_ref[...], preferred_element_type=jnp.float32)
    # Bias + ReLU strictly in f32 on the VPU (v5e-safe).
    h = jnp.maximum(h + b1_ref[...], 0.0)
    # Layer 2.
    y = jnp.dot(h.astype(w2_ref.dtype), w2_ref[...],
                preferred_element_type=jnp.float32)
    o_ref[...] = (y + b2_ref[...]).astype(o_ref.dtype)   # bf16 writeback


def prepare_params(w1, b1, w2, b2, mxu_dtype=jnp.bfloat16):
    """One-time parameter prep (NOT in the per-call hot path).

    Pre-transposes the PyTorch [out, in] weights to [in, out] so the kernel is
    a plain [M,K]x[K,N] contraction, zero-pads hidden/output feature dims to
    lane multiples (128), pads the input feature dim only to the sublane
    multiple (8), and casts the matmul operands to bf16. Zero padding is exact
    for this computation.
    """
    hidden, in_dim = w1.shape
    out_dim = w2.shape[0]
    in_p = _round_up(in_dim, 8)      # contraction dim of layer 1 (sublane-aligned)
    h_p = _round_up(hidden, 128)     # lane-dense hidden
    out_p = _round_up(out_dim, 128)  # lane-dense output

    w1_t = jnp.zeros((in_p, h_p), mxu_dtype).at[:in_dim, :hidden].set(
        w1.T.astype(mxu_dtype))
    w2_t = jnp.zeros((h_p, out_p), mxu_dtype).at[:hidden, :out_dim].set(
        w2.T.astype(mxu_dtype))
    b1_p = jnp.zeros((1, h_p), jnp.float32).at[0, :hidden].set(
        b1.astype(jnp.float32))
    b2_p = jnp.zeros((1, out_p), jnp.float32).at[0, :out_dim].set(
        b2.astype(jnp.float32))
    return (w1_t, b1_p, w2_t, b2_p), (in_dim, hidden, out_dim)


@functools.partial(jax.jit, static_argnames=("dims",))
def network_ex_forward(x, params, dims):
    """x: [B, input_size] f32. params from prepare_params(). Returns [B, output]."""
    w1_t, b1_p, w2_t, b2_p = params
    in_dim, hidden, out_dim = dims
    in_p, h_p = w1_t.shape
    out_p = w2_t.shape[1]

    B = x.shape[0]
    b8 = _round_up(B, 8)  # sublane multiple

    # Batch tile: as large as possible (target 512 rows) to amortize the
    # ~0.35us/step pipeline overhead, but guarantee >= 2 grid steps once B > 8
    # so v7x's two TensorCores both get work on the "parallel" batch axis.
    if b8 <= 8:
        tb = b8
        b_p = b8
    else:
        n_steps = max(2, _cdiv(b8, 512))
        tb = _round_up(_cdiv(b8, n_steps), 8)
        b_p = _round_up(b8, tb)

    # Pad only the batch dim (to b_p) and the feature dim to the sublane
    # multiple (in_p), casting to the MXU dtype. No 128-wide padded x copy.
    x_p = jnp.zeros((b_p, in_p), w1_t.dtype).at[:B, :in_dim].set(
        x.astype(w1_t.dtype))

    # Advisory cost estimate for XLA's scheduler around the custom call.
    flops = 2 * b_p * (in_p * h_p + h_p * out_p)
    bytes_accessed = (b_p * in_p * 2            # x (bf16)
                      + in_p * h_p * 2          # W1 (bf16)
                      + h_p * out_p * 2         # W2 (bf16)
                      + (h_p + out_p) * 4       # biases (f32)
                      + b_p * out_p * 2)        # output (bf16)
    cost = pl.CostEstimate(flops=flops, transcendentals=0,
                           bytes_accessed=bytes_accessed)

    # VMEM footprint at tb=512 is well under 2 MiB (weights single-buffered),
    # so no explicit vmem_limit_bytes is needed even on v5e's 16 MiB default.
    out_padded = pl.pallas_call(
        _mlp_kernel,
        out_shape=jax.ShapeDtypeStruct((b_p, out_p), jnp.bfloat16),
        grid=(b_p // tb,),
        in_specs=[
            # x: steps with the grid along the batch axis.
            pl.BlockSpec((tb, in_p), lambda i: (i, 0)),
            # Weights / biases: constant index_map -> fetched once and kept
            # VMEM-resident; Buffered(1) single-buffers them (no pointless
            # double-buffer residency).
            pl.BlockSpec((in_p, h_p), lambda i: (0, 0),
                         pipeline_mode=pl.Buffered(1)),
            pl.BlockSpec((1, h_p), lambda i: (0, 0),
                         pipeline_mode=pl.Buffered(1)),
            pl.BlockSpec((h_p, out_p), lambda i: (0, 0),
                         pipeline_mode=pl.Buffered(1)),
            pl.BlockSpec((1, out_p), lambda i: (0, 0),
                         pipeline_mode=pl.Buffered(1)),
        ],
        out_specs=pl.BlockSpec((tb, out_p), lambda i: (i, 0)),
        compiler_params=pltpu.CompilerParams(
            dimension_semantics=("parallel",)),
        cost_estimate=cost,
    )(x_p, w1_t, b1_p, w2_t, b2_p)

    return out_padded[:B, :out_dim].astype(x.dtype)


def _torch_linear_init(key, out_features, in_features, dtype=jnp.float32):
    """Deterministic stand-in for torch.nn.Linear default init:
       U(-1/sqrt(fan_in), 1/sqrt(fan_in)) for weight and bias."""
    bound = 1.0 / jnp.sqrt(jnp.asarray(in_features, dtype))
    kw, kb = jax.random.split(key)
    w = jax.random.uniform(kw, (out_features, in_features), dtype,
                           minval=-bound, maxval=bound)
    b = jax.random.uniform(kb, (out_features,), dtype,
                           minval=-bound, maxval=bound)
    return w, b


def _reference(x, w1, b1, w2, b2):
    """Same math with the kernel's bf16 MXU operands / bf16 store emulated."""
    xb = x.astype(jnp.bfloat16).astype(jnp.float32)
    w1b = w1.astype(jnp.bfloat16).astype(jnp.float32)
    w2b = w2.astype(jnp.bfloat16).astype(jnp.float32)
    h = jnp.maximum(xb @ w1b.T + b1, 0.0)
    y = h.astype(jnp.bfloat16).astype(jnp.float32) @ w2b.T + b2
    return y.astype(jnp.bfloat16).astype(jnp.float32)


if __name__ == "__main__":
    # Shapes implied by the source: input = torch.randn(3, 5) -> batch=3, input_size=5.
    batch, input_size, hidden_size, output_size = 3, 5, 32, 4

    key = jax.random.PRNGKey(0)
    k_x, k_x2, k_l1, k_l2 = jax.random.split(key, 4)

    x = jax.random.normal(k_x, (batch, input_size), jnp.float32)
    w1, b1 = _torch_linear_init(k_l1, hidden_size, input_size)
    w2, b2 = _torch_linear_init(k_l2, output_size, hidden_size)

    params, dims = prepare_params(w1, b1, w2, b2)

    # Small batch (the literal spec shapes): single-tile path.
    out = jax.block_until_ready(network_ex_forward(x, params, dims))
    ref = _reference(x, w1, b1, w2, b2)
    assert out.shape == (batch, output_size)
    assert jnp.allclose(out, ref, atol=2e-2, rtol=2e-2), float(
        jnp.max(jnp.abs(out - ref)))

    # Larger batch: exercises the multi-step (>= 2 tiles) pipelined grid path.
    x_big = jax.random.normal(k_x2, (300, input_size), jnp.float32)
    out_big = jax.block_until_ready(network_ex_forward(x_big, params, dims))
    ref_big = _reference(x_big, w1, b1, w2, b2)
    assert out_big.shape == (300, output_size)
    assert jnp.allclose(out_big, ref_big, atol=2e-2, rtol=2e-2), float(
        jnp.max(jnp.abs(out_big - ref_big)))

    print("KERNEL_OK")
</pallas_src>

<mosaic_0001>
module attributes {stable_mosaic.version = 11 : i64} {
  func.func @_mlp_kernel(%arg0: i32, %arg1: memref<8x8xbf16, #tpu.memory_space<vmem>>, %arg2: memref<8x128xbf16, #tpu.memory_space<vmem>>, %arg3: memref<1x128xf32, #tpu.memory_space<vmem>>, %arg4: memref<128x128xbf16, #tpu.memory_space<vmem>>, %arg5: memref<1x128xf32, #tpu.memory_space<vmem>>, %arg6: memref<8x128xbf16, #tpu.memory_space<vmem>>) attributes {dimension_semantics = [#tpu.dimension_semantics<parallel>], iteration_bounds = array<i64: 1>, scalar_prefetch = 0 : i64, scratch_operands = 0 : i64, tpu.core_type = #tpu.core_type<tc>, window_params = [{transform_indices = @transform_0, window_bounds = array<i64: 8, 8>}, {pipeline_mode = #tpu.pipeline_mode<synchronous>, transform_indices = @transform_1, window_bounds = array<i64: 8, 128>}, {pipeline_mode = #tpu.pipeline_mode<synchronous>, transform_indices = @transform_2, window_bounds = array<i64: 1, 128>}, {pipeline_mode = #tpu.pipeline_mode<synchronous>, transform_indices = @transform_3, window_bounds = array<i64: 128, 128>}, {pipeline_mode = #tpu.pipeline_mode<synchronous>, transform_indices = @transform_4, window_bounds = array<i64: 1, 128>}, {transform_indices = @transform_5, window_bounds = array<i64: 8, 128>}]} {
    %c0 = arith.constant 0 : index
    %c0_0 = arith.constant 0 : index
    %0 = vector.load %arg1[%c0, %c0_0] : memref<8x8xbf16, #tpu.memory_space<vmem>>, vector<8x8xbf16>
    %c0_1 = arith.constant 0 : index
    %c0_2 = arith.constant 0 : index
    %1 = vector.load %arg2[%c0_1, %c0_2] : memref<8x128xbf16, #tpu.memory_space<vmem>>, vector<8x128xbf16>
    %cst = arith.constant dense<0.000000e+00> : vector<8x128xf32>
    %2 = tpu.matmul %0, %1, %cst {dimension_numbers = #tpu.dot_dimension_numbers<[1], [0], [0], [1], [0, 0, 1, 1], [], []>} : vector<8x8xbf16>, vector<8x128xbf16>, vector<8x128xf32> -> vector<8x128xf32>
    %c0_3 = arith.constant 0 : index
    %c0_4 = arith.constant 0 : index
    %3 = vector.load %arg3[%c0_3, %c0_4] : memref<1x128xf32, #tpu.memory_space<vmem>>, vector<1x128xf32>
    %4 = vector.broadcast %3 : vector<1x128xf32> to vector<8x128xf32>
    %5 = arith.addf %2, %4 : vector<8x128xf32>
    %cst_5 = arith.constant 0.000000e+00 : f32
    %6 = vector.broadcast %cst_5 : f32 to vector<8x128xf32>
    %7 = arith.maximumf %5, %6 : vector<8x128xf32>
    %8 = arith.truncf %7 : vector<8x128xf32> to vector<8x128xbf16>
    %c0_6 = arith.constant 0 : index
    %c0_7 = arith.constant 0 : index
    %9 = vector.load %arg4[%c0_6, %c0_7] : memref<128x128xbf16, #tpu.memory_space<vmem>>, vector<128x128xbf16>
    %cst_8 = arith.constant dense<0.000000e+00> : vector<8x128xf32>
    %10 = tpu.matmul %8, %9, %cst_8 {dimension_numbers = #tpu.dot_dimension_numbers<[1], [0], [0], [1], [0, 0, 1, 1], [], []>} : vector<8x128xbf16>, vector<128x128xbf16>, vector<8x128xf32> -> vector<8x128xf32>
    %c0_9 = arith.constant 0 : index
    %c0_10 = arith.constant 0 : index
    %11 = vector.load %arg5[%c0_9, %c0_10] : memref<1x128xf32, #tpu.memory_space<vmem>>, vector<1x128xf32>
    %12 = vector.broadcast %11 : vector<1x128xf32> to vector<8x128xf32>
    %13 = arith.addf %10, %12 : vector<8x128xf32>
    %14 = arith.truncf %13 : vector<8x128xf32> to vector<8x128xbf16>
    %c0_11 = arith.constant 0 : index
    %c0_12 = arith.constant 0 : index
    %15 = vector.load %arg6[%c0_11, %c0_12] : memref<8x128xbf16, #tpu.memory_space<vmem>>, vector<8x128xbf16>
    tpu.vector_store %arg6[%c0_11, %c0_12], %14 {strides = array<i32>} : memref<8x128xbf16, #tpu.memory_space<vmem>>, vector<8x128xbf16>,
    return
  }
  func.func @transform_0(%arg0: i32) -> (i32, i32) {
    %c0_i32 = arith.constant 0 : i32
    %c0_i32_0 = arith.constant 0 : i32
    return %arg0, %c0_i32 : i32, i32
  }
  func.func @transform_1(%arg0: i32) -> (i32, i32) {
    %c0_i32 = arith.constant 0 : i32
    %c0_i32_0 = arith.constant 0 : i32
    %c0_i32_1 = arith.constant 0 : i32
    return %c0_i32, %c0_i32_0 : i32, i32
  }
  func.func @transform_2(%arg0: i32) -> (i32, i32) {
    %c0_i32 = arith.constant 0 : i32
    %c0_i32_0 = arith.constant 0 : i32
    %c0_i32_1 = arith.constant 0 : i32
    return %c0_i32, %c0_i32_0 : i32, i32
  }
  func.func @transform_3(%arg0: i32) -> (i32, i32) {
    %c0_i32 = arith.constant 0 : i32
    %c0_i32_0 = arith.constant 0 : i32
    %c0_i32_1 = arith.constant 0 : i32
    return %c0_i32, %c0_i32_0 : i32, i32
  }
  func.func @transform_4(%arg0: i32) -> (i32, i32) {
    %c0_i32 = arith.constant 0 : i32
    %c0_i32_0 = arith.constant 0 : i32
    %c0_i32_1 = arith.constant 0 : i32
    return %c0_i32, %c0_i32_0 : i32, i32
  }
  func.func @transform_5(%arg0: i32) -> (i32, i32) {
    %c0_i32 = arith.constant 0 : i32
    %c0_i32_0 = arith.constant 0 : i32
    return %arg0, %c0_i32 : i32, i32
  }
}

</mosaic_0001>

<llo_original>
// kernel: network_ex_forward.1
$region0: #{network_ex_forward.1}
  #allocation0 [shape = 'u32[]', space=smem, size = 0x4, offset = 0x4, fixed_abs, tag = 'smem constant byte address 0x4 - core index']
  #allocation1 [shape = 'u32[144,128]{1,0:T(1,128)}', space=vmem, size = 0x12000, scoped, tag = 'internal scratch']
  %s0 = inlined_call_operand.vmem [shape: bf16[8,8], index: 0, kind: input, shape index: {}]
  %s1 = inlined_call_operand.vmem [shape: bf16[8,128], index: 1, kind: input, shape index: {}]
  %s2 = inlined_call_operand.vmem [shape: f32[1,128], index: 2, kind: input, shape index: {}]
  %s3 = inlined_call_operand.hbm [shape: bf16[128,128], index: 3, kind: input, shape index: {}]
  %s4 = inlined_call_operand.vmem [shape: f32[1,128], index: 4, kind: input, shape index: {}]
  %s5 = inlined_call_operand.vmem [shape: bf16[8,128], index: 5, kind: output, shape index: {}]
  %s6 = sld [smem:[#allocation0]]
  $region34: #{network_ex_forward.1} parent=0
    _
  %s8 = ssub.s32 1, %s6
  %s9 = scalar_select 0, %s8, %s6
  $region1: #{network_ex_forward.1} parent=0
    #allocation2 [shape = 'u8[32768]{0}', space=vmem, size = 0x8000, scoped, tag = 'input window, operand 3, single buffered']
    #allocation3 [shape = 's32[1]{0}', space=sflag, size = 0x4, scoped, tag = 'scoped memory for network_ex_forward.1']
    %10 = vsyncpa [#allocation3], 0
    // Predicated region
    $region2: #{network_ex_forward.1} parent=1 // pred_check
      _
    $region3: #{network_ex_forward.1} parent=1 // pred_check_branch
      %12 = sbr.rel (0) target = $region5
    $region4: #{network_ex_forward.1} parent=1 // pred_region
      _
    $region5: #{network_ex_forward.1} parent=1 // pred_fallthru
      _
    // Predicated region
    $region6: #{network_ex_forward.1} parent=1 // pred_check
      _
    $region7: #{network_ex_forward.1} parent=1 // pred_check_branch
      %14 = sbr.rel (0) target = $region9
    $region8: #{network_ex_forward.1} parent=1 // pred_region
      _
    $region9: #{network_ex_forward.1} parent=1 // pred_fallthru
      _
    // Predicated region
    $region10: #{network_ex_forward.1} parent=1 // pred_check
      _
    $region11: #{network_ex_forward.1} parent=1 // pred_check_branch
      %16 = sbr.rel (0) target = $region13
    $region12: #{network_ex_forward.1} parent=1 // pred_region
      _
    $region13: #{network_ex_forward.1} parent=1 // pred_fallthru
      _
    // Predicated region
    $region14: #{network_ex_forward.1} parent=1 // pred_check
      _
    $region15: #{network_ex_forward.1} parent=1 // pred_check_branch
      %18 = sbr.rel (0) target = $region17
    $region16: #{network_ex_forward.1} parent=1 // pred_region
      %s20 = ssub.s32 1024, 1024
      %21 = vsyncadd [#allocation3], %s20
      %s22 = sshll.u32 [#allocation2], 4
      %s23 = int_to_ptr.vmem [resolvable:$true] %s22
      %28 = dma.hbm_to_vmem [thread:$0]  %s3, 1024, %s23, [#allocation3], 64, 64, 4
    $region17: #{network_ex_forward.1} parent=1 // pred_fallthru
      _
    // Predicated region
    $region18: #{network_ex_forward.1} parent=1 // pred_check
      _
    $region19: #{network_ex_forward.1} parent=1 // pred_check_branch
      %30 = sbr.rel (0) target = $region21
    $region20: #{network_ex_forward.1} parent=1 // pred_region
      _
    $region21: #{network_ex_forward.1} parent=1 // pred_fallthru
      _
    // Predicated region
    $region22: #{network_ex_forward.1} parent=1 // pred_check
      _
    $region23: #{network_ex_forward.1} parent=1 // pred_check_branch
      %32 = sbr.rel (0) target = $region25
    $region24: #{network_ex_forward.1} parent=1 // pred_region
      %33 = dma.done [#allocation3], 1024
    $region25: #{network_ex_forward.1} parent=1 // pred_fallthru
      _
    %v35 = vld [vmem:[%s0] sm:$0xf]
    %v36 = vld [vmem:[%s1] sm:$0xf]
    %v37 = vld [vmem:[%s2] sm:$0x1]
    %v39 = vlaneseq
    %v40 = vshrl.u32 %v39, 7
    %v41 = vsub.s32 0, %v40
    %v42 = vrot.slane %v37, %v41
    %vm44 = vcmask 64512
    %v46 = vsel %vm44, %v35, 0
    %vm48 = vcmask 1043456
    %v50 = vsel %vm48, %v36, 0
    %52 = vmatprep.subr.bf16.mxu0 0
    %53 = vmatpush1.bf16.msra.mxu0 %v50
    %54 = vmatprep.subr.bf16.mxu0 0
    %55 = vmatpush1.bf16.msra.mxu0 0
    %56 = vmatprep.subr.bf16.mxu0 0
    %57 = vmatpush1.bf16.msra.mxu0 0
    %58 = vmatprep.subr.bf16.mxu0 0
    %59 = vmatpush1.bf16.msra.mxu0 0
    %60 = vmatprep.subr.bf16.mxu0 0
    %61 = vmatpush1.bf16.msra.mxu0 0
    %62 = vmatprep.subr.bf16.mxu0 0
    %63 = vmatpush1.bf16.msra.mxu0 0
    %64 = vmatprep.subr.bf16.mxu0 0
    %65 = vmatpush1.bf16.msra.mxu0 0
    %66 = vmatprep.subr.bf16.mxu0 0
    %67 = vmatpush1.bf16.msra.mxu0 0
    %68 = vmatprep.subr.bf16.mxu0 0
    %69 = vmatpush1.bf16.msra.mxu0 0
    %70 = vmatprep.subr.bf16.mxu0 0
    %71 = vmatpush1.bf16.msra.mxu0 0
    %72 = vmatprep.subr.bf16.mxu0 0
    %73 = vmatpush1.bf16.msra.mxu0 0
    %74 = vmatprep.subr.bf16.mxu0 0
    %75 = vmatpush1.bf16.msra.mxu0 0
    %76 = vmatprep.subr.bf16.mxu0 0
    %77 = vmatpush1.bf16.msra.mxu0 0
    %78 = vmatprep.subr.bf16.mxu0 0
    %79 = vmatpush1.bf16.msra.mxu0 0
    %80 = vmatprep.subr.bf16.mxu0 0
    %81 = vmatpush1.bf16.msra.mxu0 0
    %82 = vmatprep.subr.bf16.mxu0 0
    %83 = vmatpush1.bf16.msra.mxu0 0
    %84 = vmatprep.mubr.bf16.mxu0 0
    %85 = vmatmul.mubr.bf16.gmra.mrb[0].mxu0 %v46
    %v86 = vpop.f32.mrb[0].mxu0
    %v87 = vadd.f32 %v42, %v86
    %v88 = vpop.f32.mrb[0].mxu0
    %v89 = vpop.f32.mrb[0].mxu0
    %v90 = vpop.f32.mrb[0].mxu0
    %91 = vdwg.mxu0
    %v92 = vmax.f32 %v87, 0.0
    %v93 = vpack.c.bf16 %v92, %v92
    %v94 = vld [vmem:[#allocation2] sm:$0xf]
    %v95 = vld [vmem:[#allocation2 + $0x4] sm:$0xf]
    %v96 = vld [vmem:[#allocation2 + $0x8] sm:$0xf]
    %v97 = vld [vmem:[#allocation2 + $0xc] sm:$0xf]
    %v98 = vld [vmem:[#allocation2 + $0x10] sm:$0xf]
    %v99 = vld [vmem:[#allocation2 + $0x14] sm:$0xf]
    %v100 = vld [vmem:[#allocation2 + $0x18] sm:$0xf]
    %v101 = vld [vmem:[#allocation2 + $0x1c] sm:$0xf]
    %v102 = vld [vmem:[#allocation2 + $0x20] sm:$0xf]
    %v103 = vld [vmem:[#allocation2 + $0x24] sm:$0xf]
    %v104 = vld [vmem:[#allocation2 + $0x28] sm:$0xf]
    %v105 = vld [vmem:[#allocation2 + $0x2c] sm:$0xf]
    %v106 = vld [vmem:[#allocation2 + $0x30] sm:$0xf]
    %v107 = vld [vmem:[#allocation2 + $0x34] sm:$0xf]
    %v108 = vld [vmem:[#allocation2 + $0x38] sm:$0xf]
    %v109 = vld [vmem:[#allocation2 + $0x3c] sm:$0xf]
    %v110 = vld [vmem:[%s4] sm:$0x1]
    %v112 = vlaneseq
    %v113 = vshrl.u32 %v112, 7
    %v114 = vsub.s32 0, %v113
    %v115 = vrot.slane %v110, %v114
    %v133 = vunpack.c.l.b16 %v94
    %v134 = vunpack.c.l.b16 %v95
    %v135 = vunpack.c.l.b16 %v96
    %v136 = vunpack.c.l.b16 %v97
    %v137 = vunpack.c.l.b16 %v98
    %v138 = vunpack.c.l.b16 %v99
    %v139 = vunpack.c.l.b16 %v100
    %v140 = vunpack.c.l.b16 %v101
    %v141 = vunpack.c.l.b16 %v102
    %v142 = vunpack.c.l.b16 %v103
    %v143 = vunpack.c.l.b16 %v104
    %v144 = vunpack.c.l.b16 %v105
    %v145 = vunpack.c.l.b16 %v106
    %v146 = vunpack.c.l.b16 %v107
    %v147 = vunpack.c.l.b16 %v108
    %v148 = vunpack.c.l.b16 %v109
    %v149 = vpack.c.b16 %v134, %v133
    %v150 = vpack.c.b16 %v136, %v135
    %v151 = vpack.c.b16 %v138, %v137
    %v152 = vpack.c.b16 %v140, %v139
    %v153 = vpack.c.b16 %v142, %v141
    %v154 = vpack.c.b16 %v144, %v143
    %v155 = vpack.c.b16 %v146, %v145
    %v156 = vpack.c.b16 %v148, %v147
    %165 = vmatprep.subr.bf16.mxu0 0
    %166 = vmatpush1.bf16.msra.mxu0 %v149
    %167 = vmatprep.subr.bf16.mxu0 0
    %168 = vmatpush1.bf16.msra.mxu0 %v150
    %169 = vmatprep.subr.bf16.mxu0 0
    %170 = vmatpush1.bf16.msra.mxu0 %v151
    %171 = vmatprep.subr.bf16.mxu0 0
    %172 = vmatpush1.bf16.msra.mxu0 %v152
    %173 = vmatprep.subr.bf16.mxu0 0
    %174 = vmatpush1.bf16.msra.mxu0 %v153
    %175 = vmatprep.subr.bf16.mxu0 0
    %176 = vmatpush1.bf16.msra.mxu0 %v154
    %177 = vmatprep.subr.bf16.mxu0 0
    %178 = vmatpush1.bf16.msra.mxu0 %v155
    %179 = vmatprep.subr.bf16.mxu0 0
    %180 = vmatpush1.bf16.msra.mxu0 %v156
    %181 = vmatprep.subr.bf16.mxu0 0
    %182 = vmatpush1.bf16.msra.mxu0 0
    %183 = vmatprep.subr.bf16.mxu0 0
    %184 = vmatpush1.bf16.msra.mxu0 0
    %185 = vmatprep.subr.bf16.mxu0 0
    %186 = vmatpush1.bf16.msra.mxu0 0
    %187 = vmatprep.subr.bf16.mxu0 0
    %188 = vmatpush1.bf16.msra.mxu0 0
    %189 = vmatprep.subr.bf16.mxu0 0
    %190 = vmatpush1.bf16.msra.mxu0 0
    %191 = vmatprep.subr.bf16.mxu0 0
    %192 = vmatpush1.bf16.msra.mxu0 0
    %193 = vmatprep.subr.bf16.mxu0 0
    %194 = vmatpush1.bf16.msra.mxu0 0
    %195 = vmatprep.subr.bf16.mxu0 0
    %196 = vmatpush1.bf16.msra.mxu0 0
    %197 = vmatprep.mubr.bf16.mxu0 0
    %198 = vmatmul.mubr.bf16.gmra.mrb[0].mxu0 %v93
    %v199 = vpop.f32.mrb[0].mxu0
    %v200 = vadd.f32 %v115, %v199
    %v201 = vpop.f32.mrb[0].mxu0
    %v202 = vpop.f32.mrb[0].mxu0
    %v203 = vpop.f32.mrb[0].mxu0
    %204 = vdwg.mxu0
    %v205 = vpack.c.bf16 %v200, %v200
    %206 = vst [vmem:[%s5] sm:$0xf] %v205
    // Predicated region
    $region26: #{network_ex_forward.1} parent=1 // pred_check
      _
    $region27: #{network_ex_forward.1} parent=1 // pred_check_branch
      %208 = sbr.rel (0) target = $region29
    $region28: #{network_ex_forward.1} parent=1 // pred_region
      _
    $region29: #{network_ex_forward.1} parent=1 // pred_fallthru
      _
    // Predicated region
    $region30: #{network_ex_forward.1} parent=1 // pred_check
      _
    $region31: #{network_ex_forward.1} parent=1 // pred_check_branch
      %210 = sbr.rel (0) target = $region33
    $region32: #{network_ex_forward.1} parent=1 // pred_region
      _
    $region33: #{network_ex_forward.1} parent=1 // pred_fallthru
      _
    %211 = vsyncpa [#allocation3], 1

</llo_original>
